<compile_context>
chip_gen: v5e
topology: v5e:2x2
jax: 0.10.0
libtpu: 0.0.40
codegen_flags: <defaults>
</compile_context>

<pallas_src>
import math
from functools import lru_cache

import jax
import jax.numpy as jnp
from jax.experimental import pallas as pl
from jax.experimental.pallas import tpu as pltpu
from jax.scipy.linalg import block_diag

BN_EPS = 1e-5
_VMEM_LIMIT = 32 * 1024 * 1024   # raise v5e's 16 MiB scoped default; <= v6e/v7x default


def _detect_v7x():
    try:
        kind = jax.devices()[0].device_kind.lower()
        return ("v7" in kind) or ("tpu7" in kind)
    except Exception:
        return False


_IS_V7X = _detect_v7x()


# ----------------------------------------------------------------------------
# Small helpers
# ----------------------------------------------------------------------------
def _round_up(x, m):
    return (x + m - 1) // m * m


def _pick_tile(d, cap):
    """Largest power-of-two tile <= cap that divides d (d is a multiple of 8)."""
    for t in (512, 256, 128, 64, 32, 16, 8):
        if t <= cap and t <= d and d % t == 0:
            return t
    return d


# ----------------------------------------------------------------------------
# Pallas kernels
# ----------------------------------------------------------------------------
@lru_cache(maxsize=None)
def _build_matmul(Mp, K, Np, tm, tn, activation, out_dtype_name):
    """out = act(A @ B + bias).  A (Mp,K) bf16, B (K,Np) bf16, bias (1,Np) f32.
    Full-K blocks: no K grid axis, no accumulator scratch."""
    out_dtype = jnp.dtype(out_dtype_name)

    def kernel(a_ref, b_ref, bias_ref, o_ref):
        r = jnp.dot(a_ref[...], b_ref[...],
                    preferred_element_type=jnp.float32) + bias_ref[...]
        if activation == "relu":
            r = jnp.maximum(r, 0.0)
        o_ref[...] = r.astype(o_ref.dtype)

    call = pl.pallas_call(
        kernel,
        out_shape=jax.ShapeDtypeStruct((Mp, Np), out_dtype),
        grid_spec=pltpu.PrefetchScalarGridSpec(
            num_scalar_prefetch=0,
            grid=(Mp // tm, Np // tn),
            in_specs=[
                pl.BlockSpec((tm, K), lambda i, j: (i, 0)),
                pl.BlockSpec((K, tn), lambda i, j: (0, j)),
                pl.BlockSpec((1, tn), lambda i, j: (0, j)),
            ],
            out_specs=pl.BlockSpec((tm, tn), lambda i, j: (i, j)),
        ),
        compiler_params=pltpu.CompilerParams(
            dimension_semantics=("parallel", "parallel"),
            vmem_limit_bytes=_VMEM_LIMIT),
    )
    return jax.jit(call)


def matmul_bias_act(a, w, bias, activation="none", out_dtype=jnp.bfloat16):
    """a: (M, K); w: (K, Np) bf16 pre-padded; bias: (1, Np) f32."""
    M, K = a.shape
    Kw, Np = w.shape
    assert K == Kw, (K, Kw)
    Mp = _round_up(M, 8)
    tm = _pick_tile(Mp, 256)
    tn = _pick_tile(Np, 512)
    # Megacore N-split only pays off on v7x (2 TCs); on v5e/v6e it just halves
    # weight-DMA granularity for no parallelism benefit.
    if _IS_V7X and Mp // tm == 1 and Np // tn == 1 and Np >= 256:
        tn = Np // 2
    a = a.astype(jnp.bfloat16)
    if Mp != M:
        a = jnp.pad(a, ((0, Mp - M), (0, 0)))
    out = _build_matmul(Mp, K, Np, tm, tn, activation,
                        jnp.dtype(out_dtype).name)(a, w, bias)
    return out[:M] if Mp != M else out


@lru_cache(maxsize=None)
def _build_grouped_matmul(Mp, C, tm):
    """Block-diagonal grouped 3x3 conv matmul (layers 1-2, og = 4/8).
    A is (Mp, nc*9*128) chunk-major; B holds one (9*128, 128) slab per chunk."""
    nc = C // 128
    kg = 9 * 128

    def kernel(a_ref, b_ref, bias_ref, o_ref):
        acc = jnp.dot(a_ref[...], b_ref[...],
                      preferred_element_type=jnp.float32)
        o_ref[...] = jnp.maximum(acc + bias_ref[...], 0.0).astype(o_ref.dtype)

    call = pl.pallas_call(
        kernel,
        out_shape=jax.ShapeDtypeStruct((Mp, C), jnp.bfloat16),
        grid_spec=pltpu.PrefetchScalarGridSpec(
            num_scalar_prefetch=0,
            grid=(Mp // tm, nc),
            in_specs=[
                pl.BlockSpec((tm, kg), lambda i, j: (i, j)),
                pl.BlockSpec((kg, 128), lambda i, j: (j, 0)),
                pl.BlockSpec((1, 128), lambda i, j: (0, j)),
            ],
            out_specs=pl.BlockSpec((tm, 128), lambda i, j: (i, j)),
        ),
        compiler_params=pltpu.CompilerParams(
            dimension_semantics=("parallel", "parallel"),
            vmem_limit_bytes=_VMEM_LIMIT),
    )
    return jax.jit(call)


@lru_cache(maxsize=None)
def _build_group_dense_matmul(Mp, C, tm, og, Kgp):
    """Dense grouped 3x3 conv matmul (layers 3-4, og = 16/32).
    A is (Mp, nc*ng*Kgp): per chunk, ng group slabs of Kgp columns (real data
    in the first 9*og, zero padded).  W is (nc, Kgp, 128) lane-packed dense:
    W[j, t*og+k, g*og+o].  Per chunk, ng narrow dots are concatenated into a
    lane-dense 128-wide output block (no block-diag zero weight traffic)."""
    ng = 128 // og

    def kernel(a_ref, w_ref, bias_ref, o_ref):
        w = w_ref[0]                                          # (Kgp, 128)
        outs = []
        for g in range(ng):                                   # static unroll
            a_g = a_ref[:, g * Kgp:(g + 1) * Kgp]             # (tm, Kgp)
            w_g = w[:, g * og:(g + 1) * og]                   # (Kgp, og)
            outs.append(jnp.dot(a_g, w_g,
                                preferred_element_type=jnp.float32))
        acc = jnp.concatenate(outs, axis=1)                   # (tm, 128)
        o_ref[...] = jnp.maximum(acc + bias_ref[...], 0.0).astype(o_ref.dtype)

    call = pl.pallas_call(
        kernel,
        out_shape=jax.ShapeDtypeStruct((Mp, C), jnp.bfloat16),
        grid_spec=pltpu.PrefetchScalarGridSpec(
            num_scalar_prefetch=0,
            grid=(Mp // tm, C // 128),
            in_specs=[
                pl.BlockSpec((tm, ng * Kgp), lambda i, j: (i, j)),
                pl.BlockSpec((1, Kgp, 128), lambda i, j: (j, 0, 0)),
                pl.BlockSpec((1, 128), lambda i, j: (0, j)),
            ],
            out_specs=pl.BlockSpec((tm, 128), lambda i, j: (i, j)),
        ),
        compiler_params=pltpu.CompilerParams(
            dimension_semantics=("parallel", "parallel"),
            vmem_limit_bytes=_VMEM_LIMIT),
    )
    return jax.jit(call)


@lru_cache(maxsize=None)
def _build_conv_se(Nb, HW, K, C, Crp):
    """Fused bottleneck tail, one pallas_call:
       z   = y @ w3 + b3                                 (w3 1x1 conv, BN folded)
       s   = sigmoid(relu(mean_hw(z) @ w1 + b1) @ w2 + b2)   (SE, whole batch)
       out = relu(z * s + residual)
    y: (M, K) bf16, residual: (M, C) bf16 with M = Nb*HW."""
    M = Nb * HW
    rows8 = _round_up(Nb, 8)

    def kernel(y_ref, r_ref, w3_ref, b3_ref, w1_ref, b1_ref, w2_ref, b2_ref,
               o_ref):
        z = jnp.dot(y_ref[...], w3_ref[...],
                    preferred_element_type=jnp.float32) + b3_ref[...]   # (M,C)
        pooled = [jnp.mean(z[n * HW:(n + 1) * HW, :], axis=0, keepdims=True)
                  for n in range(Nb)]
        if rows8 > Nb:
            pooled.append(jnp.zeros((rows8 - Nb, C), jnp.float32))
        p = jnp.concatenate(pooled, axis=0)                              # (8,C)
        h = jnp.dot(p.astype(jnp.bfloat16), w1_ref[...],
                    preferred_element_type=jnp.float32) + b1_ref[...]
        h = jnp.maximum(h, 0.0)
        s = jax.nn.sigmoid(
            jnp.dot(h.astype(jnp.bfloat16), w2_ref[...],
                    preferred_element_type=jnp.float32) + b2_ref[...])   # (8,C)
        srows = jnp.concatenate(
            [jnp.broadcast_to(s[n:n + 1, :], (HW, C)) for n in range(Nb)],
            axis=0)                                                      # (M,C)
        out = jnp.maximum(z * srows + r_ref[...].astype(jnp.float32), 0.0)
        o_ref[...] = out.astype(o_ref.dtype)

    call = pl.pallas_call(
        kernel,
        out_shape=jax.ShapeDtypeStruct((M, C), jnp.bfloat16),
        grid_spec=pltpu.PrefetchScalarGridSpec(
            num_scalar_prefetch=0,
            grid=(1,),
            in_specs=[
                pl.BlockSpec((M, K), lambda i: (0, 0)),
                pl.BlockSpec((M, C), lambda i: (0, 0)),
                pl.BlockSpec((K, C), lambda i: (0, 0)),
                pl.BlockSpec((1, C), lambda i: (0, 0)),
                pl.BlockSpec((C, Crp), lambda i: (0, 0)),
                pl.BlockSpec((1, Crp), lambda i: (0, 0)),
                pl.BlockSpec((Crp, C), lambda i: (0, 0)),
                pl.BlockSpec((1, C), lambda i: (0, 0)),
            ],
            out_specs=pl.BlockSpec((M, C), lambda i: (0, 0)),
        ),
        compiler_params=pltpu.CompilerParams(
            dimension_semantics=("arbitrary",),
            vmem_limit_bytes=_VMEM_LIMIT),
    )
    return jax.jit(call)


@lru_cache(maxsize=None)
def _build_window_max(Mp, K, C, tm):
    """Max over the window axis of (Mp, K, C) patches, gridded over rows."""

    def kernel(x_ref, o_ref):
        o_ref[...] = jnp.max(x_ref[...], axis=1)

    return jax.jit(pl.pallas_call(
        kernel,
        out_shape=jax.ShapeDtypeStruct((Mp, C), jnp.bfloat16),
        grid_spec=pltpu.PrefetchScalarGridSpec(
            num_scalar_prefetch=0,
            grid=(Mp // tm,),
            in_specs=[pl.BlockSpec((tm, K, C), lambda i: (i, 0, 0))],
            out_specs=pl.BlockSpec((tm, C), lambda i: (i, 0)),
        ),
        compiler_params=pltpu.CompilerParams(
            dimension_semantics=("parallel",),
            vmem_limit_bytes=_VMEM_LIMIT),
    ))


@lru_cache(maxsize=None)
def _build_final_pool(Nb, HW, C):
    """(Nb*HW, C) -> (round_up(Nb,8), C) f32 slab of 0.5*(avg+max) per sample
    (pad rows zero) so the head matmul consumes it without re-padding."""
    M = Nb * HW
    rows8 = _round_up(Nb, 8)

    def kernel(x_ref, o_ref):
        x = x_ref[...].astype(jnp.float32)
        rows = []
        for n in range(Nb):
            xn = x[n * HW:(n + 1) * HW, :]
            rows.append(0.5 * (jnp.mean(xn, axis=0, keepdims=True)
                               + jnp.max(xn, axis=0, keepdims=True)))
        if rows8 > Nb:
            rows.append(jnp.zeros((rows8 - Nb, C), jnp.float32))
        o_ref[...] = jnp.concatenate(rows, axis=0)

    return jax.jit(pl.pallas_call(
        kernel,
        out_shape=jax.ShapeDtypeStruct((rows8, C), jnp.float32),
        grid_spec=pltpu.PrefetchScalarGridSpec(
            num_scalar_prefetch=0,
            grid=(1,),
            in_specs=[pl.BlockSpec((M, C), lambda i: (0, 0))],
            out_specs=pl.BlockSpec((rows8, C), lambda i: (0, 0)),
        ),
        compiler_params=pltpu.CompilerParams(
            dimension_semantics=("arbitrary",),
            vmem_limit_bytes=_VMEM_LIMIT),
    ))


# ----------------------------------------------------------------------------
# Glue: im2col + conv wrappers (weights BN-folded, pre-permuted, pre-padded)
# ----------------------------------------------------------------------------
def _im2col(x, kh, kw, stride, pad):
    # x: (N, H, W, C) -> patches (N, Ho, Wo, kh*kw, C)   [tap-major]
    N, H, W, C = x.shape
    xp = jnp.pad(x, ((0, 0), (pad, pad), (pad, pad), (0, 0)))
    Ho = (H + 2 * pad - kh) // stride + 1
    Wo = (W + 2 * pad - kw) // stride + 1
    cols = [xp[:, i:i + stride * (Ho - 1) + 1:stride,
               j:j + stride * (Wo - 1) + 1:stride, :]
            for i in range(kh) for j in range(kw)]
    return jnp.stack(cols, axis=3), Ho, Wo


def conv1x1(x, w, bias, activation, stride=1):
    if stride > 1:
        x = x[:, ::stride, ::stride, :]
    N, H, W, C = x.shape
    out = matmul_bias_act(x.reshape(N * H * W, C), w, bias, activation)
    return out.reshape(N, H, W, w.shape[1])


def conv_stem(x, w, bias):
    # 7x7 stride-2 pad-3 conv, BN folded, relu; K padded to 160, Nout to 128.
    N = x.shape[0]
    patches, Ho, Wo = _im2col(x, 7, 7, 2, 3)            # (N,Ho,Wo,49,3)
    a = patches.reshape(N * Ho * Wo, 49 * x.shape[3])
    a = jnp.pad(a, ((0, 0), (0, w.shape[0] - a.shape[1])))
    out = matmul_bias_act(a, w, bias, "relu")
    return out.reshape(N, Ho, Wo, w.shape[1])


def conv3x3_grouped(x, w_blocks, bias, stride):
    # 32-group 3x3 conv (BN folded, relu), block-diagonal per-chunk slabs.
    N, H, W, C = x.shape
    nc = C // 128
    xp = jnp.pad(x, ((0, 0), (1, 1), (1, 1), (0, 0)))
    Ho = (H + 2 - 3) // stride + 1
    Wo = (W + 2 - 3) // stride + 1
    cols = [xp[:, i:i + stride * (Ho - 1) + 1:stride,
               j:j + stride * (Wo - 1) + 1:stride, :]
            .reshape(N, Ho, Wo, nc, 128)
            for i in range(3) for j in range(3)]
    a = jnp.stack(cols, axis=4).reshape(N * Ho * Wo, nc * 9 * 128)
    M = N * Ho * Wo
    Mp = _round_up(M, 8)
    a = a.astype(jnp.bfloat16)
    if Mp != M:
        a = jnp.pad(a, ((0, Mp - M), (0, 0)))
    tm = _pick_tile(Mp, 256)
    out = _build_grouped_matmul(Mp, C, tm)(a, w_blocks, bias)
    if Mp != M:
        out = out[:M]
    return out.reshape(N, Ho, Wo, C)


def conv3x3_group_dense(x, w_dense, bias, stride, og):
    # 32-group 3x3 conv (BN folded, relu) with dense per-group weights
    # (layers 3-4).  A columns are chunk-major, then group, then (tap, k)
    # padded to Kgp so all in-kernel slices are 128-aligned.
    N, H, W, C = x.shape
    nc = C // 128
    ng = 128 // og
    Kg = 9 * og
    Kgp = w_dense.shape[1]
    xp = jnp.pad(x, ((0, 0), (1, 1), (1, 1), (0, 0)))
    Ho = (H + 2 - 3) // stride + 1
    Wo = (W + 2 - 3) // stride + 1
    cols = [xp[:, i:i + stride * (Ho - 1) + 1:stride,
               j:j + stride * (Wo - 1) + 1:stride, :]
            .reshape(N, Ho, Wo, nc, ng, og)
            for i in range(3) for j in range(3)]
    a = jnp.stack(cols, axis=5)                         # (N,Ho,Wo,nc,ng,9,og)
    M = N * Ho * Wo
    a = a.reshape(M, nc, ng, Kg)
    if Kgp != Kg:
        a = jnp.pad(a, ((0, 0), (0, 0), (0, 0), (0, Kgp - Kg)))
    a = a.reshape(M, nc * ng * Kgp).astype(jnp.bfloat16)
    Mp = _round_up(M, 8)
    if Mp != M:
        a = jnp.pad(a, ((0, Mp - M), (0, 0)))
    tm = _pick_tile(Mp, 256)
    out = _build_group_dense_matmul(Mp, C, tm, og, Kgp)(a, w_dense, bias)
    if Mp != M:
        out = out[:M]
    return out.reshape(N, Ho, Wo, C)


def maxpool_3x3_s2_ceil(x):
    # nn.MaxPool2d(3, stride=2, ceil_mode=True); input is post-ReLU (>= 0).
    N, H, W, C = x.shape
    Ho = -((H - 3) // -2) + 1
    Wo = -((W - 3) // -2) + 1
    ph = (Ho - 1) * 2 + 3 - H
    pw = (Wo - 1) * 2 + 3 - W
    xp = jnp.pad(x, ((0, 0), (0, ph), (0, pw), (0, 0)),
                 constant_values=-jnp.inf)
    cols = [xp[:, i:i + 2 * (Ho - 1) + 1:2, j:j + 2 * (Wo - 1) + 1:2, :]
            for i in range(3) for j in range(3)]
    flat = jnp.stack(cols, axis=3).reshape(N * Ho * Wo, 9, C)
    M = N * Ho * Wo
    Mp = _round_up(M, 8)
    if Mp != M:
        flat = jnp.pad(flat, ((0, Mp - M), (0, 0), (0, 0)))
    tm = _pick_tile(Mp, 256)
    out = _build_window_max(Mp, 9, C, tm)(flat)
    if Mp != M:
        out = out[:M]
    return out.reshape(N, Ho, Wo, C)


# ----------------------------------------------------------------------------
# Deterministic synthetic parameters (SE-ResNeXt50_32x4d), BN folded,
# pre-permuted / pre-padded / pre-cast at build time.
# ----------------------------------------------------------------------------
class ParamGen:
    def __init__(self, seed):
        self.key = jax.random.PRNGKey(seed)
        self.i = 0

    def next(self):
        self.i += 1
        return jax.random.fold_in(self.key, self.i)


def _make_bn(pg, c):
    return dict(
        gamma=jax.random.uniform(pg.next(), (c,), jnp.float32, 0.5, 1.5),
        beta=jax.random.normal(pg.next(), (c,), jnp.float32) * 0.1,
        mean=jax.random.normal(pg.next(), (c,), jnp.float32) * 0.1,
        var=jax.random.uniform(pg.next(), (c,), jnp.float32, 0.5, 1.5),
    )


def _conv1x1_params(pg, cout, cin):
    w = jax.random.normal(pg.next(), (cout, cin), jnp.float32) / math.sqrt(cin)
    bn = _make_bn(pg, cout)
    scale = bn["gamma"] / jnp.sqrt(bn["var"] + BN_EPS)
    bias = bn["beta"] - bn["mean"] * scale
    w2d = (w * scale[:, None]).T                      # (cin, cout)
    Kp, Np = _round_up(cin, 128), _round_up(cout, 128)
    w2d = jnp.pad(w2d, ((0, Kp - cin), (0, Np - cout))).astype(jnp.bfloat16)
    bias = jnp.pad(bias, (0, Np - cout)).reshape(1, Np).astype(jnp.float32)
    return w2d, bias


def _conv3x3_grouped_params(pg, width, groups):
    # Block-diagonal slabs (layers 1-2).
    og = width // groups
    w = jax.random.normal(pg.next(), (width, og, 3, 3), jnp.float32)
    w = w / math.sqrt(og * 9)
    bn = _make_bn(pg, width)
    scale = bn["gamma"] / jnp.sqrt(bn["var"] + BN_EPS)
    w = w * scale[:, None, None, None]
    bias = (bn["beta"] - bn["mean"] * scale).reshape(1, width).astype(jnp.float32)
    nc = width // 128
    ng = 128 // og
    blocks = []
    for j in range(nc):               # chunk-major, then tap, matching A layout
        for t in range(9):
            ki, kj = divmod(t, 3)
            mats = [w[(j * ng + g) * og:(j * ng + g + 1) * og, :, ki, kj].T
                    for g in range(ng)]
            blocks.append(block_diag(*mats))          # (128, 128)
    B = jnp.concatenate(blocks, axis=0).astype(jnp.bfloat16)   # (nc*1152, 128)
    return B, bias


def _conv3x3_group_dense_params(pg, width, groups):
    # Dense lane-packed per-group weights (layers 3-4): W[j, t*og+k, g*og+o].
    og = width // groups
    w = jax.random.normal(pg.next(), (width, og, 3, 3), jnp.float32)
    w = w / math.sqrt(og * 9)
    bn = _make_bn(pg, width)
    scale = bn["gamma"] / jnp.sqrt(bn["var"] + BN_EPS)
    w = w * scale[:, None, None, None]
    bias = (bn["beta"] - bn["mean"] * scale).reshape(1, width).astype(jnp.float32)
    nc = width // 128
    ng = 128 // og
    Kg = 9 * og
    Kgp = _round_up(Kg, 128)
    w6 = w.reshape(nc, ng, og, og, 3, 3)              # (j, g, o, k, ti, tj)
    w6 = jnp.transpose(w6, (0, 4, 5, 3, 1, 2))        # (j, ti, tj, k, g, o)
    Wd = w6.reshape(nc, Kg, 128)
    Wd = jnp.pad(Wd, ((0, 0), (0, Kgp - Kg), (0, 0))).astype(jnp.bfloat16)
    return Wd, bias


def _se_params(pg, c, reduction):
    cr = c // reduction
    crp = _round_up(cr, 128)
    w1 = (jax.random.normal(pg.next(), (cr, c), jnp.float32) / math.sqrt(c)).T
    b1 = jax.random.normal(pg.next(), (cr,), jnp.float32) * 0.01
    w2 = (jax.random.normal(pg.next(), (c, cr), jnp.float32) / math.sqrt(cr)).T
    b2 = jax.random.normal(pg.next(), (c,), jnp.float32) * 0.01
    w1 = jnp.pad(w1, ((0, 0), (0, crp - cr))).astype(jnp.bfloat16)   # (c, crp)
    b1 = jnp.pad(b1, (0, crp - cr)).reshape(1, crp).astype(jnp.float32)
    w2 = jnp.pad(w2, ((0, crp - cr), (0, 0))).astype(jnp.bfloat16)   # (crp, c)
    b2 = b2.reshape(1, c).astype(jnp.float32)
    return w1, b1, w2, b2


def build_params(seed=0):
    pg = ParamGen(seed)
    P = {}

    # layer0: conv7x7 s2 p3 (3->64, bias=False) + BN; tap-major rows,
    # padded to K=160 / N=128 (extra output channels are exactly zero).
    w = jax.random.normal(pg.next(), (64, 3, 7, 7), jnp.float32) / math.sqrt(147)
    bn = _make_bn(pg, 64)
    scale = bn["gamma"] / jnp.sqrt(bn["var"] + BN_EPS)
    bias = bn["beta"] - bn["mean"] * scale
    w2d = jnp.transpose(w * scale[:, None, None, None],
                        (2, 3, 1, 0)).reshape(147, 64)
    P["layer0"] = (
        jnp.pad(w2d, ((0, 160 - 147), (0, 128 - 64))).astype(jnp.bfloat16),
        jnp.pad(bias, (0, 128 - 64)).reshape(1, 128).astype(jnp.float32),
    )

    groups, reduction = 32, 16
    cfgs = [(64, 3), (128, 4), (256, 6), (512, 3)]
    inplanes = 64
    layers = []
    for planes, blocks in cfgs:
        width = planes * 4 // 64 * groups      # base_width=4
        og = width // groups
        outc = planes * 4
        blist = []
        for b_i in range(blocks):
            inc = inplanes if b_i == 0 else outc
            blk = {}
            blk["w1"], blk["b1"] = _conv1x1_params(pg, width, inc)
            if og >= 16:
                blk["w2"], blk["b2"] = _conv3x3_group_dense_params(pg, width, groups)
            else:
                blk["w2"], blk["b2"] = _conv3x3_grouped_params(pg, width, groups)
            blk["w3"], blk["b3"] = _conv1x1_params(pg, outc, width)
            if b_i == 0:
                blk["wd"], blk["bd"] = _conv1x1_params(pg, outc, inc)
            (blk["se_w1"], blk["se_b1"],
             blk["se_w2"], blk["se_b2"]) = _se_params(pg, outc, reduction)
            blist.append(blk)
        layers.append(blist)
        inplanes = outc
    P["layers"] = layers

    # head: nn.Linear(2048, 186), padded to 256 outputs
    wl = (jax.random.normal(pg.next(), (186, 2048), jnp.float32)
          / math.sqrt(2048)).T
    bl = jax.random.normal(pg.next(), (186,), jnp.float32) * 0.01
    P["lin_w"] = jnp.pad(wl, ((0, 0), (0, 256 - 186))).astype(jnp.bfloat16)
    P["lin_b"] = jnp.pad(bl, (0, 256 - 186)).reshape(1, 256).astype(jnp.float32)
    return P


# ----------------------------------------------------------------------------
# Forward pass
# ----------------------------------------------------------------------------
def se_bottleneck(x, blk, stride):
    out = conv1x1(x, blk["w1"], blk["b1"], "relu")
    width = out.shape[3]
    if blk["w2"].ndim == 3:                           # dense grouped (layers 3-4)
        out = conv3x3_group_dense(out, blk["w2"], blk["b2"], stride,
                                  og=width // 32)
    else:                                             # block-diag (layers 1-2)
        out = conv3x3_grouped(out, blk["w2"], blk["b2"], stride)
    if "wd" in blk:
        residual = conv1x1(x, blk["wd"], blk["bd"], "none", stride=stride)
    else:
        residual = x
    N, H, W, _ = out.shape
    outc = blk["w3"].shape[1]
    crp = blk["se_w1"].shape[1]
    M = N * H * W
    y = _build_conv_se(N, H * W, width, outc, crp)(
        out.reshape(M, width), residual.reshape(M, outc),
        blk["w3"], blk["b3"],
        blk["se_w1"], blk["se_b1"], blk["se_w2"], blk["se_b2"])
    return y.reshape(N, H, W, outc)


def forward(P, x_nchw):
    # inputs.repeat(1, 3, 1, 1)
    x = jnp.tile(x_nchw, (1, 3, 1, 1))
    x = jnp.transpose(x, (0, 2, 3, 1)).astype(jnp.bfloat16)    # NCHW -> NHWC
    w0, b0 = P["layer0"]
    x = conv_stem(x, w0, b0)                # conv + BN + ReLU (128 padded ch)
    x = maxpool_3x3_s2_ceil(x)
    for li, blist in enumerate(P["layers"]):
        for bi, blk in enumerate(blist):
            stride = 2 if (li > 0 and bi == 0) else 1
            x = se_bottleneck(x, blk, stride)
    N, H, W, C = x.shape
    comb8 = _build_final_pool(N, H * W, C)(x.reshape(N * H * W, C))
    # Dropout(0.2) x5 is identity at inference -> averaged heads == one linear.
    y = matmul_bias_act(comb8, P["lin_w"], P["lin_b"], "none",
                        out_dtype=jnp.float32)
    y = y[:N, :186]
    return y[:, :11], y[:, 11:179], y[:, 179:186]


if __name__ == "__main__":
    key = jax.random.PRNGKey(0)
    x = jax.random.normal(key, (2, 1, 64, 64), jnp.float32)    # (N, 1, H, W)
    params = build_params(seed=0)
    fwd = jax.jit(forward)
    x1, x2, x3 = fwd(params, x)
    jax.block_until_ready((x1, x2, x3))
    assert x1.shape == (2, 11) and x2.shape == (2, 168) and x3.shape == (2, 7)
    assert bool(jnp.all(jnp.isfinite(x1)) & jnp.all(jnp.isfinite(x2))
                & jnp.all(jnp.isfinite(x3)))
    print("KERNEL_OK")
</pallas_src>

<mosaic_0001>
module attributes {stable_mosaic.version = 11 : i64} {
  func.func @kernel(%arg0: i32, %arg1: i32, %arg2: memref<256x160xbf16, #tpu.memory_space<vmem>>, %arg3: memref<160x128xbf16, #tpu.memory_space<vmem>>, %arg4: memref<1x128xf32, #tpu.memory_space<vmem>>, %arg5: memref<256x128xbf16, #tpu.memory_space<vmem>>) attributes {dimension_semantics = [#tpu.dimension_semantics<parallel>, #tpu.dimension_semantics<parallel>], iteration_bounds = array<i64: 8, 1>, scalar_prefetch = 0 : i64, scratch_operands = 0 : i64, tpu.core_type = #tpu.core_type<tc>, window_params = [{transform_indices = @transform_0, window_bounds = array<i64: 256, 160>}, {transform_indices = @transform_1, window_bounds = array<i64: 160, 128>}, {transform_indices = @transform_2, window_bounds = array<i64: 1, 128>}, {transform_indices = @transform_3, window_bounds = array<i64: 256, 128>}]} {
    %c0 = arith.constant 0 : index
    %c0_0 = arith.constant 0 : index
    %0 = vector.load %arg2[%c0, %c0_0] : memref<256x160xbf16, #tpu.memory_space<vmem>>, vector<256x160xbf16>
    %c0_1 = arith.constant 0 : index
    %c0_2 = arith.constant 0 : index
    %1 = vector.load %arg3[%c0_1, %c0_2] : memref<160x128xbf16, #tpu.memory_space<vmem>>, vector<160x128xbf16>
    %cst = arith.constant dense<0.000000e+00> : vector<256x128xf32>
    %2 = tpu.matmul %0, %1, %cst {dimension_numbers = #tpu.dot_dimension_numbers<[1], [0], [0], [1], [0, 0, 1, 1], [], []>} : vector<256x160xbf16>, vector<160x128xbf16>, vector<256x128xf32> -> vector<256x128xf32>
    %c0_3 = arith.constant 0 : index
    %c0_4 = arith.constant 0 : index
    %3 = vector.load %arg4[%c0_3, %c0_4] : memref<1x128xf32, #tpu.memory_space<vmem>>, vector<1x128xf32>
    %4 = vector.broadcast %3 : vector<1x128xf32> to vector<256x128xf32>
    %5 = arith.addf %2, %4 : vector<256x128xf32>
    %cst_5 = arith.constant 0.000000e+00 : f32
    %6 = vector.broadcast %cst_5 : f32 to vector<256x128xf32>
    %7 = arith.maximumf %5, %6 : vector<256x128xf32>
    %8 = arith.truncf %7 : vector<256x128xf32> to vector<256x128xbf16>
    %c0_6 = arith.constant 0 : index
    %c0_7 = arith.constant 0 : index
    %9 = vector.load %arg5[%c0_6, %c0_7] : memref<256x128xbf16, #tpu.memory_space<vmem>>, vector<256x128xbf16>
    tpu.vector_store %arg5[%c0_6, %c0_7], %8 {strides = array<i32>} : memref<256x128xbf16, #tpu.memory_space<vmem>>, vector<256x128xbf16>,
    return
  }
  func.func @transform_0(%arg0: i32, %arg1: i32) -> (i32, i32) {
    %c0_i32 = arith.constant 0 : i32
    %c0_i32_0 = arith.constant 0 : i32
    return %arg0, %c0_i32 : i32, i32
  }
  func.func @transform_1(%arg0: i32, %arg1: i32) -> (i32, i32) {
    %c0_i32 = arith.constant 0 : i32
    %c0_i32_0 = arith.constant 0 : i32
    return %c0_i32, %arg1 : i32, i32
  }
  func.func @transform_2(%arg0: i32, %arg1: i32) -> (i32, i32) {
    %c0_i32 = arith.constant 0 : i32
    %c0_i32_0 = arith.constant 0 : i32
    return %c0_i32, %arg1 : i32, i32
  }
  func.func @transform_3(%arg0: i32, %arg1: i32) -> (i32, i32) {
    %c0_i32 = arith.constant 0 : i32
    return %arg0, %arg1 : i32, i32
  }
}

</mosaic_0001>

<llo_original>
// kernel: tpu_custom_call.1
$region0: #{tpu_custom_call.1}
  #allocation0 [shape = 'u32[]', space=smem, size = 0x4, offset = 0x4, fixed_abs, tag = 'smem constant byte address 0x4 - core index']
  #allocation1 [shape = 'u32[72,128]{1,0:T(1,128)}', space=vmem, size = 0x9000, scoped, tag = 'internal scratch']
  %s0 = inlined_call_operand.vmem [shape: bf16[2048,160], index: 0, kind: input, shape index: {}]
  %s1 = inlined_call_operand.vmem [shape: bf16[160,128], index: 1, kind: input, shape index: {}]
  %s2 = inlined_call_operand.vmem [shape: f32[1,128], index: 2, kind: input, shape index: {}]
  %s3 = inlined_call_operand.hbm [shape: bf16[2048,128], index: 3, kind: output, shape index: {}]
  %s4 = sld [smem:[#allocation0]]
  $region45: #{tpu_custom_call.1} parent=0
    _
  %s6 = ssub.s32 1, %s4
  %s7 = scalar_select 0, %s6, %s4
  $region1: #{tpu_custom_call.1} parent=0
    #allocation2 [shape = 'u8[131072]{0}', space=vmem, size = 0x20000, scoped, tag = 'output window, operand 0']
    #allocation3 [shape = 's32[2]{0}', space=sflag, size = 0x8, scoped, tag = 'scoped memory for tpu_custom_call.1']
    %8 = vsyncpa [#allocation3], 0
    %s9 = scalar_lea.sflag [#allocation3], 1
    %10 = vsyncpa %s9, 0
    loop: start=0, step=1, limit=10
    $region2: #{tpu_custom_call.1} parent=1 // loop_pre_header
      _
    $region3: #{tpu_custom_call.1} parent=1 // loop_header
      %s12 = sphi 0, %s16
      %p13 = scmp.ge.s32.totalorder %s12, 10
      %s19 = sphi 0, %s31
      %s20 = sphi 0, %s27
      %s21 = sphi 0, %s19
      %s22 = sphi 0, %s20
      %s23 = sphi 0, %s21
      %s24 = sphi 0, %s22
      %s34 = sphi 0, %s36
      %s37 = sphi 0, %s34
      %s38 = sphi 0, %s37
      %s54 = sphi 0, %s38
      %s60 = sphi 0, %s62
      %s63 = sphi 0, %s60
      %s64 = sphi 0, %s63
      %s80 = sphi 0, %s64
      %s86 = sphi 0, %s88
      %s89 = sphi 0, %s86
      %s90 = sphi 0, %s89
      %s106 = sphi 0, %s90
      %s114 = sphi 0, %s116
      %s117 = sphi 0, %s114
      %s118 = sphi 0, %s117
      %s134 = sphi 0, %s118
    $region4: #{tpu_custom_call.1} parent=1 // loop_header_branch
      %15 = sbr.rel (%p13) target = $region8
    $region5: #{tpu_custom_call.1} parent=1 // loop_body
      %s17 = ssub.s32 %s12, 1
      %s18 = ssub.s32 %s12, 2
      %s25 = sadd.s32 1, %s20
      %p26 = scmp.ge.s32.totalorder %s25, 1
      %s27 = scalar_select %p26, 0, %s25
      %s28 = sadd.s32 1, %s19
      %s29 = scalar_select %p26, %s28, %s19
      %p30 = scmp.ge.s32.totalorder %s29, 8
      %s31 = scalar_select %p30, 0, %s29
      %s32 = ssub.s32 %s19, %s31
      %p33 = scmp.eq.s32.totalorder %s32, 0
      %s35 = sadd.s32 %s34, 1
      %s36 = scalar_select %p33, %s34, %s35
      %p39 = pneg %p33
      %p40 = scmp.eq.s32.totalorder %s12, 7
      %p41 = por %p39, %p40
      %p42 = scmp.ne.s32.totalorder %s34, %s37
      %p43 = scmp.eq.s32.totalorder %s12, 0
      %p44 = por %p42, %p43
      %p45 = scmp.ne.s32.totalorder %s34, %s37
      %p46 = scmp.eq.s32.totalorder %s17, 7
      %p47 = por %p45, %p46
      %p48 = scmp.ne.s32.totalorder %s37, %s38
      %p49 = scmp.eq.s32.totalorder %s17, 0
      %p50 = por %p48, %p49
      %p51 = scmp.ne.s32.totalorder %s37, %s38
      %p52 = scmp.eq.s32.totalorder %s18, 7
      %p53 = por %p51, %p52
      %p55 = scmp.ne.s32.totalorder %s38, %s54
      %p56 = scmp.eq.s32.totalorder %s18, 0
      %p57 = por %p55, %p56
      %s58 = ssub.s32 %s20, %s27
      %p59 = scmp.eq.s32.totalorder %s58, 0
      %s61 = sadd.s32 %s60, 1
      %s62 = scalar_select %p59, %s60, %s61
      %p65 = pneg %p59
      %p66 = scmp.eq.s32.totalorder %s12, 7
      %p67 = por %p65, %p66
      %p68 = scmp.ne.s32.totalorder %s60, %s63
      %p69 = scmp.eq.s32.totalorder %s12, 0
      %p70 = por %p68, %p69
      %p71 = scmp.ne.s32.totalorder %s60, %s63
      %p72 = scmp.eq.s32.totalorder %s17, 7
      %p73 = por %p71, %p72
      %p74 = scmp.ne.s32.totalorder %s63, %s64
      %p75 = scmp.eq.s32.totalorder %s17, 0
      %p76 = por %p74, %p75
      %p77 = scmp.ne.s32.totalorder %s63, %s64
      %p78 = scmp.eq.s32.totalorder %s18, 7
      %p79 = por %p77, %p78
      %p81 = scmp.ne.s32.totalorder %s64, %s80
      %p82 = scmp.eq.s32.totalorder %s18, 0
      %p83 = por %p81, %p82
      %s84 = ssub.s32 %s20, %s27
      %p85 = scmp.eq.s32.totalorder %s84, 0
      %s87 = sadd.s32 %s86, 1
      %s88 = scalar_select %p85, %s86, %s87
      %p91 = pneg %p85
      %p92 = scmp.eq.s32.totalorder %s12, 7
      %p93 = por %p91, %p92
      %p94 = scmp.ne.s32.totalorder %s86, %s89
      %p95 = scmp.eq.s32.totalorder %s12, 0
      %p96 = por %p94, %p95
      %p97 = scmp.ne.s32.totalorder %s86, %s89
      %p98 = scmp.eq.s32.totalorder %s17, 7
      %p99 = por %p97, %p98
      %p100 = scmp.ne.s32.totalorder %s89, %s90
      %p101 = scmp.eq.s32.totalorder %s17, 0
      %p102 = por %p100, %p101
      %p103 = scmp.ne.s32.totalorder %s89, %s90
      %p104 = scmp.eq.s32.totalorder %s18, 7
      %p105 = por %p103, %p104
      %p107 = scmp.ne.s32.totalorder %s90, %s106
      %p108 = scmp.eq.s32.totalorder %s18, 0
      %p109 = por %p107, %p108
      %s110 = ssub.s32 %s19, %s31
      %s111 = ssub.s32 %s20, %s27
      %s112 = sor.u32 %s110, %s111
      %p113 = scmp.eq.s32.totalorder %s112, 0
      %s115 = sadd.s32 %s114, 1
      %s116 = scalar_select %p113, %s114, %s115
      %p119 = pneg %p113
      %p120 = scmp.eq.s32.totalorder %s12, 7
      %p121 = por %p119, %p120
      %p122 = scmp.ne.s32.totalorder %s114, %s117
      %p123 = scmp.eq.s32.totalorder %s12, 0
      %p124 = por %p122, %p123
      %p125 = scmp.ne.s32.totalorder %s114, %s117
      %p126 = scmp.eq.s32.totalorder %s17, 7
      %p127 = por %p125, %p126
      %p128 = scmp.ne.s32.totalorder %s117, %s118
      %p129 = scmp.eq.s32.totalorder %s17, 0
      %p130 = por %p128, %p129
      %p131 = scmp.ne.s32.totalorder %s117, %s118
      %p132 = scmp.eq.s32.totalorder %s18, 7
      %p133 = por %p131, %p132
      %p135 = scmp.ne.s32.totalorder %s118, %s134
      %p136 = scmp.eq.s32.totalorder %s18, 0
      %p137 = por %p135, %p136
      %p138 = scmp.le.s32.totalorder 1, %s12
      %p139 = scmp.lt.s32.totalorder %s12, 9
      %p140 = pnand %p138, %p139
      %p141 = pneg %p140
      // Predicated region
      $region9: #{tpu_custom_call.1} parent=5 // pred_check
        _
      $region10: #{tpu_custom_call.1} parent=5 // pred_check_branch
        %143 = sbr.rel (%p140) target = $region12
      $region11: #{tpu_custom_call.1} parent=5 // pred_region
        %s144 = ssub.s32 %s12, 1
        // Predicated region
        $region13: #{tpu_custom_call.1} parent=11 // pred_check
          %p145 = pneg %p76
        $region14: #{tpu_custom_call.1} parent=11 // pred_check_branch
          %147 = sbr.rel (%p145) target = $region16
        $region15: #{tpu_custom_call.1} parent=11 // pred_region
          %p148 = scmp.lt.s32.totalorder %s22, 0
          %s149 = scalar_select %p148, %s22, 0
          %s150 = smul.addr %s149, 4
          %s151 = scalar_lea.vmem %s1, %s150
        $region16: #{tpu_custom_call.1} parent=11 // pred_fallthru
          _
        // Predicated region
        $region17: #{tpu_custom_call.1} parent=11 // pred_check
          %p152 = pneg %p102
        $region18: #{tpu_custom_call.1} parent=11 // pred_check_branch
          %154 = sbr.rel (%p152) target = $region20
        $region19: #{tpu_custom_call.1} parent=11 // pred_region
          %p155 = scmp.lt.s32.totalorder %s22, 0
          %s156 = scalar_select %p155, %s22, 0
          %s157 = scalar_lea.vmem %s2, %s156
        $region20: #{tpu_custom_call.1} parent=11 // pred_fallthru
          _
      $region12: #{tpu_custom_call.1} parent=5 // pred_fallthru
        _
      %p158 = scmp.lt.s32.totalorder %s12, 8
      // Predicated region
      $region21: #{tpu_custom_call.1} parent=5 // pred_check
        %p159 = pneg %p158
      $region22: #{tpu_custom_call.1} parent=5 // pred_check_branch
        %161 = sbr.rel (%p159) target = $region24
      $region23: #{tpu_custom_call.1} parent=5 // pred_region
        // Predicated region
        $region25: #{tpu_custom_call.1} parent=23 // pred_check
          %p162 = pneg %p44
        $region26: #{tpu_custom_call.1} parent=23 // pred_check_branch
          %164 = sbr.rel (%p162) target = $region28
        $region27: #{tpu_custom_call.1} parent=23 // pred_region
          %s165 = smul.u32 32, %s19
          %p166 = scmp.lt.s32.totalorder %s165, 255
          %s167 = scalar_select %p166, %s165, 255
          %s168 = smul.addr %s167, 2
          %s169 = smul.addr %s168, 4
          %s170 = scalar_lea.vmem %s0, %s169
          %s171 = smul.u32 32, %s19
        $region28: #{tpu_custom_call.1} parent=23 // pred_fallthru
          _
      $region24: #{tpu_custom_call.1} parent=5 // pred_fallthru
        _
      %p172 = scmp.le.s32.totalorder 1, %s12
      %p173 = scmp.lt.s32.totalorder %s12, 9
      %p174 = pnand %p172, %p173
      %p175 = pneg %p174
      // Predicated region
      $region29: #{tpu_custom_call.1} parent=5 // pred_check
        _
      $region30: #{tpu_custom_call.1} parent=5 // pred_check_branch
        %177 = sbr.rel (%p174) target = $region32
      $region31: #{tpu_custom_call.1} parent=5 // pred_region
        %s178 = ssub.s32 %s12, 1
        %s179 = smul.u32 32, %s21
        %p180 = scmp.lt.s32.totalorder %s179, 255
        %s181 = scalar_select %p180, %s179, 255
        %s182 = smul.addr %s181, 2
        %s183 = smul.addr %s182, 4
        %s184 = scalar_lea.vmem %s0, %s183
        %p185 = pneg %p50
        %p186 = pneg %p47
        %p187 = scmp.lt.s32.totalorder %s22, 0
        %s188 = scalar_select %p187, %s22, 0
        %s189 = smul.addr %s188, 4
        %s190 = scalar_lea.vmem %s1, %s189
        %p191 = pneg %p76
        %p192 = pneg %p73
        %p193 = scmp.lt.s32.totalorder %s22, 0
        %s194 = scalar_select %p193, %s22, 0
        %s195 = scalar_lea.vmem %s2, %s194
        %p196 = pneg %p102
        %p197 = pneg %p99
        %p198 = pneg %p130
        %p199 = pneg %p127
        %s200 = sand.u32 %s117, 1
        %s201 = scalar_lea.sflag [#allocation3], %s200
        %s202 = sand.u32 %s117, 1
        %s203 = smul.addr %s202, 128
        %s204 = scalar_lea.vmem [#allocation2], %s203
        %s205 = smul.u32 32, %s21
        %p206 = scmp.lt.s32.totalorder %s205, 255
        %s207 = scalar_select %p206, %s205, 255
        %s208 = smul.addr %s207, 2
        %s209 = smul.addr %s208, 4
        %s210 = scalar_lea.vmem %s0, %s209
        %s211 = smul.u32 32, %s21
        %p212 = scmp.lt.s32.totalorder %s22, 0
        %s213 = scalar_select %p212, %s22, 0
        %s214 = smul.addr %s213, 4
        %s215 = scalar_lea.vmem %s1, %s214
        %p216 = scmp.lt.s32.totalorder %s22, 0
        %s217 = scalar_select %p216, %s22, 0
        %s218 = scalar_lea.vmem %s2, %s217
        %s219 = smul.u32 32, %s21
        %v221 = vld [vmem:[%s210] sm:$0xff]
        %v222 = vld [vmem:[%s210 + $0x8] sm:$0xff]
        %v223 = vld [vmem:[%s210 + $0x10] sm:$0xff]
        %v224 = vld [vmem:[%s210 + $0x18] sm:$0xff]
        %v225 = vld [vmem:[%s210 + $0x20] sm:$0xff]
        %v226 = vld [vmem:[%s210 + $0x28] sm:$0xff]
        %v227 = vld [vmem:[%s210 + $0x30] sm:$0xff]
        %v228 = vld [vmem:[%s210 + $0x38] sm:$0xff]
        %v229 = vld [vmem:[%s210 + $0x40] sm:$0xff]
        %v230 = vld [vmem:[%s210 + $0x48] sm:$0xff]
        %v231 = vld [vmem:[%s210 + $0x50] sm:$0xff]
        %v232 = vld [vmem:[%s210 + $0x58] sm:$0xff]
        %v233 = vld [vmem:[%s210 + $0x60] sm:$0xff]
        %v234 = vld [vmem:[%s210 + $0x68] sm:$0xff]
        %v235 = vld [vmem:[%s210 + $0x70] sm:$0xff]
        %v236 = vld [vmem:[%s210 + $0x78] sm:$0xff]
        %v237 = vld [vmem:[%s210 + $0x80] sm:$0xff]
        %v238 = vld [vmem:[%s210 + $0x88] sm:$0xff]
        %v239 = vld [vmem:[%s210 + $0x90] sm:$0xff]
        %v240 = vld [vmem:[%s210 + $0x98] sm:$0xff]
        %v241 = vld [vmem:[%s210 + $0xa0] sm:$0xff]
        %v242 = vld [vmem:[%s210 + $0xa8] sm:$0xff]
        %v243 = vld [vmem:[%s210 + $0xb0] sm:$0xff]
        %v244 = vld [vmem:[%s210 + $0xb8] sm:$0xff]
        %v245 = vld [vmem:[%s210 + $0xc0] sm:$0xff]
        %v246 = vld [vmem:[%s210 + $0xc8] sm:$0xff]
        %v247 = vld [vmem:[%s210 + $0xd0] sm:$0xff]
        %v248 = vld [vmem:[%s210 + $0xd8] sm:$0xff]
        %v249 = vld [vmem:[%s210 + $0xe0] sm:$0xff]
        %v250 = vld [vmem:[%s210 + $0xe8] sm:$0xff]
        %v251 = vld [vmem:[%s210 + $0xf0] sm:$0xff]
        %v252 = vld [vmem:[%s210 + $0xf8] sm:$0xff]
        %v253 = vld [vmem:[%s215] sm:$0xf]
        %v254 = vld [vmem:[%s215 + $0x4] sm:$0xf]
        %v255 = vld [vmem:[%s215 + $0x8] sm:$0xf]
        %v256 = vld [vmem:[%s215 + $0xc] sm:$0xf]
        %v257 = vld [vmem:[%s215 + $0x10] sm:$0xf]
        %v258 = vld [vmem:[%s215 + $0x14] sm:$0xf]
        %v259 = vld [vmem:[%s215 + $0x18] sm:$0xf]
        %v260 = vld [vmem:[%s215 + $0x1c] sm:$0xf]
        %v261 = vld [vmem:[%s215 + $0x20] sm:$0xf]
        %v262 = vld [vmem:[%s215 + $0x24] sm:$0xf]
        %v263 = vld [vmem:[%s215 + $0x28] sm:$0xf]
        %v264 = vld [vmem:[%s215 + $0x2c] sm:$0xf]
        %v265 = vld [vmem:[%s215 + $0x30] sm:$0xf]
        %v266 = vld [vmem:[%s215 + $0x34] sm:$0xf]
        %v267 = vld [vmem:[%s215 + $0x38] sm:$0xf]
        %v268 = vld [vmem:[%s215 + $0x3c] sm:$0xf]
        %v269 = vld [vmem:[%s215 + $0x40] sm:$0xf]
        %v270 = vld [vmem:[%s215 + $0x44] sm:$0xf]
        %v271 = vld [vmem:[%s215 + $0x48] sm:$0xf]
        %v272 = vld [vmem:[%s215 + $0x4c] sm:$0xf]
        %v273 = vld [vmem:[%s218] sm:$0x1]
        %v275 = vperm.slane %v273, 0
        %v309 = vunpack.c.l.b16 %v221
        %v310 = vunpack.c.h.b16 %v221
        %v311 = vunpack.c.l.b16 %v222
        %v312 = vunpack.c.h.b16 %v222
        %v313 = vunpack.c.l.b16 %v223
        %v314 = vunpack.c.h.b16 %v223
        %v315 = vunpack.c.l.b16 %v224
        %v316 = vunpack.c.h.b16 %v224
        %v317 = vunpack.c.l.b16 %v225
        %v318 = vunpack.c.h.b16 %v225
        %v319 = vunpack.c.l.b16 %v226
        %v320 = vunpack.c.h.b16 %v226
        %v321 = vunpack.c.l.b16 %v227
        %v322 = vunpack.c.h.b16 %v227
        %v323 = vunpack.c.l.b16 %v228
        %v324 = vunpack.c.h.b16 %v228
        %v325 = vunpack.c.l.b16 %v229
        %v326 = vunpack.c.h.b16 %v229
        %v327 = vunpack.c.l.b16 %v230
        %v328 = vunpack.c.h.b16 %v230
        %v329 = vunpack.c.l.b16 %v231
        %v330 = vunpack.c.h.b16 %v231
        %v331 = vunpack.c.l.b16 %v232
        %v332 = vunpack.c.h.b16 %v232
        %v333 = vunpack.c.l.b16 %v233
        %v334 = vunpack.c.h.b16 %v233
        %v335 = vunpack.c.l.b16 %v234
        %v336 = vunpack.c.h.b16 %v234
        %v337 = vunpack.c.l.b16 %v235
        %v338 = vunpack.c.h.b16 %v235
        %v339 = vunpack.c.l.b16 %v236
        %v340 = vunpack.c.h.b16 %v236
        %v341 = vunpack.c.l.b16 %v237
        %v342 = vunpack.c.h.b16 %v237
        %v343 = vunpack.c.l.b16 %v238
        %v344 = vunpack.c.h.b16 %v238
        %v345 = vunpack.c.l.b16 %v239
        %v346 = vunpack.c.h.b16 %v239
        %v347 = vunpack.c.l.b16 %v240
        %v348 = vunpack.c.h.b16 %v240
        %v349 = vunpack.c.l.b16 %v241
        %v350 = vunpack.c.h.b16 %v241
        %v351 = vunpack.c.l.b16 %v242
        %v352 = vunpack.c.h.b16 %v242
        %v353 = vunpack.c.l.b16 %v243
        %v354 = vunpack.c.h.b16 %v243
        %v355 = vunpack.c.l.b16 %v244
        %v356 = vunpack.c.h.b16 %v244
        %v357 = vunpack.c.l.b16 %v245
        %v358 = vunpack.c.h.b16 %v245
        %v359 = vunpack.c.l.b16 %v246
        %v360 = vunpack.c.h.b16 %v246
        %v361 = vunpack.c.l.b16 %v247
        %v362 = vunpack.c.h.b16 %v247
        %v363 = vunpack.c.l.b16 %v248
        %v364 = vunpack.c.h.b16 %v248
        %v365 = vunpack.c.l.b16 %v249
        %v366 = vunpack.c.h.b16 %v249
        %v367 = vunpack.c.l.b16 %v250
        %v368 = vunpack.c.h.b16 %v250
        %v369 = vunpack.c.l.b16 %v251
        %v370 = vunpack.c.h.b16 %v251
        %v371 = vunpack.c.l.b16 %v252
        %v372 = vunpack.c.h.b16 %v252
        %v373 = vpack.c.b16 %v311, %v309
        %v374 = vpack.c.b16 %v312, %v310
        %v375 = vpack.c.b16 %v315, %v313
        %v376 = vpack.c.b16 %v316, %v314
        %v377 = vpack.c.b16 %v319, %v317
        %v378 = vpack.c.b16 %v320, %v318
        %v379 = vpack.c.b16 %v323, %v321
        %v380 = vpack.c.b16 %v324, %v322
        %v381 = vpack.c.b16 %v327, %v325
        %v382 = vpack.c.b16 %v328, %v326
        %v383 = vpack.c.b16 %v331, %v329
        %v384 = vpack.c.b16 %v332, %v330
        %v385 = vpack.c.b16 %v335, %v333
        %v386 = vpack.c.b16 %v336, %v334
        %v387 = vpack.c.b16 %v339, %v337
        %v388 = vpack.c.b16 %v340, %v338
        %v389 = vpack.c.b16 %v343, %v341
        %v390 = vpack.c.b16 %v344, %v342
        %v391 = vpack.c.b16 %v347, %v345
        %v392 = vpack.c.b16 %v348, %v346
        %v393 = vpack.c.b16 %v351, %v349
        %v394 = vpack.c.b16 %v352, %v350
        %v395 = vpack.c.b16 %v355, %v353
        %v396 = vpack.c.b16 %v356, %v354
        %v397 = vpack.c.b16 %v359, %v357
        %v398 = vpack.c.b16 %v360, %v358
        %v399 = vpack.c.b16 %v363, %v361
        %v400 = vpack.c.b16 %v364, %v362
        %v401 = vpack.c.b16 %v367, %v365
        %v402 = vpack.c.b16 %v368, %v366
        %v403 = vpack.c.b16 %v371, %v369
        %v404 = vpack.c.b16 %v372, %v370
        %v441 = vunpack.c.l.b16 %v253
        %v442 = vunpack.c.l.b16 %v254
        %v443 = vunpack.c.l.b16 %v255
        %v444 = vunpack.c.l.b16 %v256
        %v445 = vunpack.c.l.b16 %v257
        %v446 = vunpack.c.l.b16 %v258
        %v447 = vunpack.c.l.b16 %v259
        %v448 = vunpack.c.l.b16 %v260
        %v449 = vunpack.c.l.b16 %v261
        %v450 = vunpack.c.l.b16 %v262
        %v451 = vunpack.c.l.b16 %v263
        %v452 = vunpack.c.l.b16 %v264
        %v453 = vunpack.c.l.b16 %v265
        %v454 = vunpack.c.l.b16 %v266
        %v455 = vunpack.c.l.b16 %v267
        %v456 = vunpack.c.l.b16 %v268
        %v457 = vunpack.c.l.b16 %v269
        %v458 = vunpack.c.l.b16 %v270
        %v459 = vunpack.c.l.b16 %v271
        %v460 = vunpack.c.l.b16 %v272
        %v461 = vpack.c.b16 %v442, %v441
        %v462 = vpack.c.b16 %v444, %v443
        %v463 = vpack.c.b16 %v446, %v445
        %v464 = vpack.c.b16 %v448, %v447
        %v465 = vpack.c.b16 %v450, %v449
        %v466 = vpack.c.b16 %v452, %v451
        %v467 = vpack.c.b16 %v454, %v453
        %v468 = vpack.c.b16 %v456, %v455
        %v469 = vpack.c.b16 %v458, %v457
        %v470 = vpack.c.b16 %v460, %v459
        %vm481 = vcmask 261120
        %v483 = vsel %vm481, %v374, 0
        %v486 = vsel %vm481, %v376, 0
        %v489 = vsel %vm481, %v378, 0
        %v492 = vsel %vm481, %v380, 0
        %v495 = vsel %vm481, %v382, 0
        %v498 = vsel %vm481, %v384, 0
        %v501 = vsel %vm481, %v386, 0
        %v504 = vsel %vm481, %v388, 0
        %v507 = vsel %vm481, %v390, 0
        %v510 = vsel %vm481, %v392, 0
        %v513 = vsel %vm481, %v394, 0
        %v516 = vsel %vm481, %v396, 0
        %v519 = vsel %vm481, %v398, 0
        %v522 = vsel %vm481, %v400, 0
        %v525 = vsel %vm481, %v402, 0
        %v528 = vsel %vm481, %v404, 0
        %530 = vmatpush.bf16.msra.mxu0 %v468
        %531 = vmatpush.bf16.msra.mxu0 %v467
        %532 = vmatpush.bf16.msra.mxu0 %v466
        %533 = vmatpush.bf16.msra.mxu0 %v465
        %534 = vmatpush.bf16.msra.mxu0 %v464
        %535 = vmatpush.bf16.msra.mxu0 %v463
        %536 = vmatpush.bf16.msra.mxu0 %v462
        %537 = vmatpush.bf16.msra.mxu0 %v461
        %538 = vmatmul.bf16.gmra.mxu0 %v373
        %v539 = vpop.f32.mrf.mxu0
        %v540 = vadd.f32 %v275, %v539
        %v541 = vpop.f32.mrf.mxu0
        %v542 = vadd.f32 %v275, %v541
        %543 = vmatmul.bf16.gmra.mxu0 %v375
        %v544 = vpop.f32.mrf.mxu0
        %v545 = vadd.f32 %v275, %v544
        %v546 = vpop.f32.mrf.mxu0
        %v547 = vadd.f32 %v275, %v546
        %548 = vmatmul.bf16.gmra.mxu0 %v377
        %v549 = vpop.f32.mrf.mxu0
        %v550 = vadd.f32 %v275, %v549
        %v551 = vpop.f32.mrf.mxu0
        %v552 = vadd.f32 %v275, %v551
        %553 = vmatmul.bf16.gmra.mxu0 %v379
        %v554 = vpop.f32.mrf.mxu0
        %v555 = vadd.f32 %v275, %v554
        %v556 = vpop.f32.mrf.mxu0
        %v557 = vadd.f32 %v275, %v556
        %558 = vmatmul.bf16.gmra.mxu0 %v381
        %v559 = vpop.f32.mrf.mxu0
        %v560 = vadd.f32 %v275, %v559
        %v561 = vpop.f32.mrf.mxu0
        %v562 = vadd.f32 %v275, %v561
        %563 = vmatmul.bf16.gmra.mxu0 %v383
        %v564 = vpop.f32.mrf.mxu0
        %v565 = vadd.f32 %v275, %v564
        %v566 = vpop.f32.mrf.mxu0
        %v567 = vadd.f32 %v275, %v566
        %568 = vmatmul.bf16.gmra.mxu0 %v385
        %v569 = vpop.f32.mrf.mxu0
        %v570 = vadd.f32 %v275, %v569
        %v571 = vpop.f32.mrf.mxu0
        %v572 = vadd.f32 %v275, %v571
        %573 = vmatmul.bf16.gmra.mxu0 %v387
        %v574 = vpop.f32.mrf.mxu0
        %v575 = vadd.f32 %v275, %v574
        %v576 = vpop.f32.mrf.mxu0
        %v577 = vadd.f32 %v275, %v576
        %578 = vmatmul.bf16.gmra.mxu0 %v389
        %v579 = vpop.f32.mrf.mxu0
        %v580 = vadd.f32 %v275, %v579
        %v581 = vpop.f32.mrf.mxu0
        %v582 = vadd.f32 %v275, %v581
        %583 = vmatmul.bf16.gmra.mxu0 %v391
        %v584 = vpop.f32.mrf.mxu0
        %v585 = vadd.f32 %v275, %v584
        %v586 = vpop.f32.mrf.mxu0
        %v587 = vadd.f32 %v275, %v586
        %588 = vmatmul.bf16.gmra.mxu0 %v393
        %v589 = vpop.f32.mrf.mxu0
        %v590 = vadd.f32 %v275, %v589
        %v591 = vpop.f32.mrf.mxu0
        %v592 = vadd.f32 %v275, %v591
        %593 = vmatmul.bf16.gmra.mxu0 %v395
        %v594 = vpop.f32.mrf.mxu0
        %v595 = vadd.f32 %v275, %v594
        %v596 = vpop.f32.mrf.mxu0
        %v597 = vadd.f32 %v275, %v596
        %598 = vmatmul.bf16.gmra.mxu0 %v397
        %v599 = vpop.f32.mrf.mxu0
        %v600 = vadd.f32 %v275, %v599
        %v601 = vpop.f32.mrf.mxu0
        %v602 = vadd.f32 %v275, %v601
        %603 = vmatmul.bf16.gmra.mxu0 %v399
        %v604 = vpop.f32.mrf.mxu0
        %v605 = vadd.f32 %v275, %v604
        %v606 = vpop.f32.mrf.mxu0
        %v607 = vadd.f32 %v275, %v606
        %608 = vmatmul.bf16.gmra.mxu0 %v401
        %v609 = vpop.f32.mrf.mxu0
        %v610 = vadd.f32 %v275, %v609
        %v611 = vpop.f32.mrf.mxu0
        %v612 = vadd.f32 %v275, %v611
        %613 = vmatmul.bf16.gmra.mxu0 %v403
        %v614 = vpop.f32.mrf.mxu0
        %v615 = vadd.f32 %v275, %v614
        %v616 = vpop.f32.mrf.mxu0
        %v617 = vadd.f32 %v275, %v616
        %618 = vdwg.mxu0
        %619 = vmatpush.bf16.msra.mxu0 0
        %620 = vmatpush.bf16.msra.mxu0 0
        %621 = vmatpush.bf16.msra.mxu0 0
        %622 = vmatpush.bf16.msra.mxu0 0
        %623 = vmatpush.bf16.msra.mxu0 0
        %624 = vmatpush.bf16.msra.mxu0 0
        %625 = vmatpush.bf16.msra.mxu0 %v470
        %626 = vmatpush.bf16.msra.mxu0 %v469
        %627 = vmatmul.bf16.gmra.mxu0 %v483
        %v628 = vpop.f32.mrf.mxu0
        %v629 = vadd.f32 %v540, %v628
        %v630 = vpop.f32.mrf.mxu0
        %v631 = vadd.f32 %v542, %v630
        %632 = vmatmul.bf16.gmra.mxu0 %v486
        %v633 = vpop.f32.mrf.mxu0
        %v634 = vadd.f32 %v545, %v633
        %v635 = vpop.f32.mrf.mxu0
        %v636 = vadd.f32 %v547, %v635
        %637 = vmatmul.bf16.gmra.mxu0 %v489
        %v638 = vpop.f32.mrf.mxu0
        %v639 = vadd.f32 %v550, %v638
        %v640 = vpop.f32.mrf.mxu0
        %v641 = vadd.f32 %v552, %v640
        %642 = vmatmul.bf16.gmra.mxu0 %v492
        %v643 = vpop.f32.mrf.mxu0
        %v644 = vadd.f32 %v555, %v643
        %v645 = vpop.f32.mrf.mxu0
        %v646 = vadd.f32 %v557, %v645
        %647 = vmatmul.bf16.gmra.mxu0 %v495
        %v648 = vpop.f32.mrf.mxu0
        %v649 = vadd.f32 %v560, %v648
        %v650 = vpop.f32.mrf.mxu0
        %v651 = vadd.f32 %v562, %v650
        %652 = vmatmul.bf16.gmra.mxu0 %v498
        %v653 = vpop.f32.mrf.mxu0
        %v654 = vadd.f32 %v565, %v653
        %v655 = vpop.f32.mrf.mxu0
        %v656 = vadd.f32 %v567, %v655
        %657 = vmatmul.bf16.gmra.mxu0 %v501
        %v658 = vpop.f32.mrf.mxu0
        %v659 = vadd.f32 %v570, %v658
        %v660 = vpop.f32.mrf.mxu0
        %v661 = vadd.f32 %v572, %v660
        %662 = vmatmul.bf16.gmra.mxu0 %v504
        %v663 = vpop.f32.mrf.mxu0
        %v664 = vadd.f32 %v575, %v663
        %v665 = vpop.f32.mrf.mxu0
        %v666 = vadd.f32 %v577, %v665
        %667 = vmatmul.bf16.gmra.mxu0 %v507
        %v668 = vpop.f32.mrf.mxu0
        %v669 = vadd.f32 %v580, %v668
        %v670 = vpop.f32.mrf.mxu0
        %v671 = vadd.f32 %v582, %v670
        %672 = vmatmul.bf16.gmra.mxu0 %v510
        %v673 = vpop.f32.mrf.mxu0
        %v674 = vadd.f32 %v585, %v673
        %v675 = vpop.f32.mrf.mxu0
        %v676 = vadd.f32 %v587, %v675
        %677 = vmatmul.bf16.gmra.mxu0 %v513
        %v678 = vpop.f32.mrf.mxu0
        %v679 = vadd.f32 %v590, %v678
        %v680 = vpop.f32.mrf.mxu0
        %v681 = vadd.f32 %v592, %v680
        %682 = vmatmul.bf16.gmra.mxu0 %v516
        %v683 = vpop.f32.mrf.mxu0
        %v684 = vadd.f32 %v595, %v683
        %v685 = vpop.f32.mrf.mxu0
        %v686 = vadd.f32 %v597, %v685
        %687 = vmatmul.bf16.gmra.mxu0 %v519
        %v688 = vpop.f32.mrf.mxu0
        %v689 = vadd.f32 %v600, %v688
        %v690 = vpop.f32.mrf.mxu0
        %v691 = vadd.f32 %v602, %v690
        %692 = vmatmul.bf16.gmra.mxu0 %v522
        %v693 = vpop.f32.mrf.mxu0
        %v694 = vadd.f32 %v605, %v693
        %v695 = vpop.f32.mrf.mxu0
        %v696 = vadd.f32 %v607, %v695
        %697 = vmatmul.bf16.gmra.mxu0 %v525
        %v698 = vpop.f32.mrf.mxu0
        %v699 = vadd.f32 %v610, %v698
        %v700 = vpop.f32.mrf.mxu0
        %v701 = vadd.f32 %v612, %v700
        %702 = vmatmul.bf16.gmra.mxu0 %v528
        %v703 = vpop.f32.mrf.mxu0
        %v704 = vadd.f32 %v615, %v703
        %v705 = vpop.f32.mrf.mxu0
        %v706 = vadd.f32 %v617, %v705
        %707 = vdwg.mxu0
        %v708 = vmax.f32 %v629, 0.0
        %v709 = vmax.f32 %v631, 0.0
        %v710 = vmax.f32 %v634, 0.0
        %v711 = vmax.f32 %v636, 0.0
        %v712 = vmax.f32 %v639, 0.0
        %v713 = vmax.f32 %v641, 0.0
        %v714 = vmax.f32 %v644, 0.0
        %v715 = vmax.f32 %v646, 0.0
        %v716 = vmax.f32 %v649, 0.0
        %v717 = vmax.f32 %v651, 0.0
        %v718 = vmax.f32 %v654, 0.0
        %v719 = vmax.f32 %v656, 0.0
        %v720 = vmax.f32 %v659, 0.0
        %v721 = vmax.f32 %v661, 0.0
        %v722 = vmax.f32 %v664, 0.0
        %v723 = vmax.f32 %v666, 0.0
        %v724 = vmax.f32 %v669, 0.0
        %v725 = vmax.f32 %v671, 0.0
        %v726 = vmax.f32 %v674, 0.0
        %v727 = vmax.f32 %v676, 0.0
        %v728 = vmax.f32 %v679, 0.0
        %v729 = vmax.f32 %v681, 0.0
        %v730 = vmax.f32 %v684, 0.0
        %v731 = vmax.f32 %v686, 0.0
        %v732 = vmax.f32 %v689, 0.0
        %v733 = vmax.f32 %v691, 0.0
        %v734 = vmax.f32 %v694, 0.0
        %v735 = vmax.f32 %v696, 0.0
        %v736 = vmax.f32 %v699, 0.0
        %v737 = vmax.f32 %v701, 0.0
        %v738 = vmax.f32 %v704, 0.0
        %v739 = vmax.f32 %v706, 0.0
        %v740 = vpack.c.bf16 %v708, %v708
        %v741 = vpack.c.bf16 %v709, %v709
        %v742 = vpack.c.bf16 %v710, %v710
        %v743 = vpack.c.bf16 %v711, %v711
        %v744 = vpack.c.bf16 %v712, %v712
        %v745 = vpack.c.bf16 %v713, %v713
        %v746 = vpack.c.bf16 %v714, %v714
        %v747 = vpack.c.bf16 %v715, %v715
        %v748 = vpack.c.bf16 %v716, %v716
        %v749 = vpack.c.bf16 %v717, %v717
        %v750 = vpack.c.bf16 %v718, %v718
        %v751 = vpack.c.bf16 %v719, %v719
        %v752 = vpack.c.bf16 %v720, %v720
        %v753 = vpack.c.bf16 %v721, %v721
        %v754 = vpack.c.bf16 %v722, %v722
        %v755 = vpack.c.bf16 %v723, %v723
        %v756 = vpack.c.bf16 %v724, %v724
        %v757 = vpack.c.bf16 %v725, %v725
        %v758 = vpack.c.bf16 %v726, %v726
        %v759 = vpack.c.bf16 %v727, %v727
        %v760 = vpack.c.bf16 %v728, %v728
        %v761 = vpack.c.bf16 %v729, %v729
        %v762 = vpack.c.bf16 %v730, %v730
        %v763 = vpack.c.bf16 %v731, %v731
        %v764 = vpack.c.bf16 %v732, %v732
        %v765 = vpack.c.bf16 %v733, %v733
        %v766 = vpack.c.bf16 %v734, %v734
        %v767 = vpack.c.bf16 %v735, %v735
        %v768 = vpack.c.bf16 %v736, %v736
        %v769 = vpack.c.bf16 %v737, %v737
        %v770 = vpack.c.bf16 %v738, %v738
        %v771 = vpack.c.bf16 %v739, %v739
        %772 = vst [vmem:[%s204] sm:$0xf] %v740
        %773 = vst [vmem:[%s204 + $0x4] sm:$0xf] %v741
        %774 = vst [vmem:[%s204 + $0x8] sm:$0xf] %v742
        %775 = vst [vmem:[%s204 + $0xc] sm:$0xf] %v743
        %776 = vst [vmem:[%s204 + $0x10] sm:$0xf] %v744
        %777 = vst [vmem:[%s204 + $0x14] sm:$0xf] %v745
        %778 = vst [vmem:[%s204 + $0x18] sm:$0xf] %v746
        %779 = vst [vmem:[%s204 + $0x1c] sm:$0xf] %v747
        %780 = vst [vmem:[%s204 + $0x20] sm:$0xf] %v748
        %781 = vst [vmem:[%s204 + $0x24] sm:$0xf] %v749
        %782 = vst [vmem:[%s204 + $0x28] sm:$0xf] %v750
        %783 = vst [vmem:[%s204 + $0x2c] sm:$0xf] %v751
        %784 = vst [vmem:[%s204 + $0x30] sm:$0xf] %v752
        %785 = vst [vmem:[%s204 + $0x34] sm:$0xf] %v753
        %786 = vst [vmem:[%s204 + $0x38] sm:$0xf] %v754
        %787 = vst [vmem:[%s204 + $0x3c] sm:$0xf] %v755
        %788 = vst [vmem:[%s204 + $0x40] sm:$0xf] %v756
        %789 = vst [vmem:[%s204 + $0x44] sm:$0xf] %v757
        %790 = vst [vmem:[%s204 + $0x48] sm:$0xf] %v758
        %791 = vst [vmem:[%s204 + $0x4c] sm:$0xf] %v759
        %792 = vst [vmem:[%s204 + $0x50] sm:$0xf] %v760
        %793 = vst [vmem:[%s204 + $0x54] sm:$0xf] %v761
        %794 = vst [vmem:[%s204 + $0x58] sm:$0xf] %v762
        %795 = vst [vmem:[%s204 + $0x5c] sm:$0xf] %v763
        %796 = vst [vmem:[%s204 + $0x60] sm:$0xf] %v764
        %797 = vst [vmem:[%s204 + $0x64] sm:$0xf] %v765
        %798 = vst [vmem:[%s204 + $0x68] sm:$0xf] %v766
        %799 = vst [vmem:[%s204 + $0x6c] sm:$0xf] %v767
        %800 = vst [vmem:[%s204 + $0x70] sm:$0xf] %v768
        %801 = vst [vmem:[%s204 + $0x74] sm:$0xf] %v769
        %802 = vst [vmem:[%s204 + $0x78] sm:$0xf] %v770
        %803 = vst [vmem:[%s204 + $0x7c] sm:$0xf] %v771
        %s804 = sand.u32 %s117, 1
        %s805 = scalar_lea.sflag [#allocation3], %s804
        %s806 = sand.u32 %s117, 1
        %s807 = smul.addr %s806, 128
        %s808 = scalar_lea.vmem [#allocation2], %s807
        // Predicated region
        $region33: #{tpu_custom_call.1} parent=31 // pred_check
          %p809 = pneg %p127
        $region34: #{tpu_custom_call.1} parent=31 // pred_check_branch
          %811 = sbr.rel (%p809) target = $region36
        $region35: #{tpu_custom_call.1} parent=31 // pred_region
          %s812 = smul.u32 32, %s21
          %814 = vsyncadd %s805, 0
          %s815 = sadd.s32 %s22, %s812
          %s816 = smul.addr %s815, 4
          %s817 = scalar_lea.hbm %s3, %s816
          %s818 = sshll.u32 %s808, 4
          %s819 = int_to_ptr.vmem [resolvable:$true] %s818
          %s820 = sshll.u32 %s817, 4
          %s821 = int_to_ptr.hbm [resolvable:$true] %s820
          %826 = dma.vmem_to_hbm [thread:$0]  %s819, 2048, %s821, %s805, 64, 64, 4
        $region36: #{tpu_custom_call.1} parent=31 // pred_fallthru
          _
      $region32: #{tpu_custom_call.1} parent=5 // pred_fallthru
        _
      %p827 = scmp.le.s32.totalorder 2, %s12
      // Predicated region
      $region37: #{tpu_custom_call.1} parent=5 // pred_check
        %p828 = pneg %p827
      $region38: #{tpu_custom_call.1} parent=5 // pred_check_branch
        %830 = sbr.rel (%p828) target = $region40
      $region39: #{tpu_custom_call.1} parent=5 // pred_region
        %s831 = ssub.s32 %s12, 2
        // Predicated region
        $region41: #{tpu_custom_call.1} parent=39 // pred_check
          %p832 = pneg %p133
        $region42: #{tpu_custom_call.1} parent=39 // pred_check_branch
          %834 = sbr.rel (%p832) target = $region44
        $region43: #{tpu_custom_call.1} parent=39 // pred_region
          %s835 = sand.u32 %s118, 1
          %s836 = scalar_lea.sflag [#allocation3], %s835
          %s837 = sand.u32 %s118, 1
          %s838 = smul.addr %s837, 128
          %s839 = scalar_lea.vmem [#allocation2], %s838
          %841 = dma.done %s836, 2048
        $region44: #{tpu_custom_call.1} parent=39 // pred_fallthru
          _
      $region40: #{tpu_custom_call.1} parent=5 // pred_fallthru
        _
    $region6: #{tpu_custom_call.1} parent=1 // loop_footer
      %s16 = sadd.s32 1, %s12
    $region7: #{tpu_custom_call.1} parent=1 // loop_footer_branch
      %11 = sbr.rel target = $region3
    $region8: #{tpu_custom_call.1} parent=1 // loop_exit
      _
    %842 = vsyncpa [#allocation3], 1
    %s843 = scalar_lea.sflag [#allocation3], 1
    %844 = vsyncpa %s843, 1

</llo_original>
